<compile_context>
chip_gen: v5e
topology: v5e:2x2
jax: 0.10.0
libtpu: 0.0.40
codegen_flags: <defaults>
</compile_context>

<pallas_src>
import functools

import jax
import jax.numpy as jnp
from jax import lax
from jax.experimental import pallas as pl
from jax.experimental.pallas import tpu as pltpu


def _round_up(x, m):
    return (x + m - 1) // m * m


def _largest_divisor_tile(n, target, granule):
    """Largest tile <= target dividing n, preferring multiples of `granule`."""
    if n <= target:
        return n
    g = (min(target, n) // granule) * granule
    while g >= granule:
        if n % g == 0:
            return g
        g -= granule
    for t in range(min(target, n), 0, -1):
        if n % t == 0:
            return t
    return n


def _vmem_estimate_bytes(n, d, tm, tn, in_itemsize):
    """Rough VMEM footprint for tile selection / vmem_limit derivation."""
    num_col_tiles = n // tn
    inputs = 2 * (tm + tn) * d * in_itemsize            # double-buffered img/txt tiles
    scaled = tm * d * in_itemsize                        # cached scale-folded img tile
    row_acc = 2 * tm * 128 * 4                           # (tm, 1) f32 pads lanes to 128
    col_acc = 2 * num_col_tiles * 8 * _round_up(tn, 128) * 4
    compute = 2 * tm * tn * 4                            # logits tile + exp temporaries
    return inputs + scaled + row_acc + col_acc + compute


def _clip_loss_kernel(n, tm, tn, num_row_tiles, num_col_tiles, compute_dtype,
                      scale_ref, img_ref, txt_ref, loss_ref,
                      img_s_ref, m_row_ref, s_row_ref, m_col_ref, s_col_ref,
                      acc_ref):
    i = pl.program_id(0)          # row tile of the logits matrix (outer)
    j = pl.program_id(1)          # col tile of the logits matrix (inner/reduction)
    scale = scale_ref[0]          # f32 scalar from SMEM (never quantized)

    # ---- accumulator / cache init -------------------------------------------
    @pl.when((i == 0) & (j == 0))
    def _():
        acc_ref[...] = jnp.zeros_like(acc_ref)

    @pl.when(j == 0)
    def _():
        # Scale fold hoisted out of the inner j loop: done once per row stripe,
        # in f32, then a single cast to the MXU compute dtype.
        img_s_ref[...] = (img_ref[...].astype(jnp.float32)
                          * scale).astype(compute_dtype)
        m_row_ref[...] = jnp.full_like(m_row_ref, -jnp.inf)
        s_row_ref[...] = jnp.zeros_like(s_row_ref)

    @pl.when(i == 0)
    def _():
        m_col_ref[j] = jnp.full(m_col_ref.shape[1:], -jnp.inf, jnp.float32)
        s_col_ref[j] = jnp.zeros(s_col_ref.shape[1:], jnp.float32)

    # ---- one (TM, TN) logits tile on the MXU (f32 accumulate) ---------------
    logits = lax.dot_general(
        img_s_ref[...], txt_ref[...],
        (((1,), (1,)), ((), ())),
        preferred_element_type=jnp.float32)              # (TM, TN)

    # ---- online logsumexp, image side (rows of logits) ----------------------
    m_prev = m_row_ref[...]                              # (TM, 1)
    m_new = jnp.maximum(m_prev, jnp.max(logits, axis=1, keepdims=True))
    p_row = jnp.exp(logits - m_new)                      # (TM, TN)
    s_row_ref[...] = (s_row_ref[...] * jnp.exp(m_prev - m_new)
                      + jnp.sum(p_row, axis=1, keepdims=True))
    m_row_ref[...] = m_new

    # ---- online logsumexp, text side (columns of logits) --------------------
    mc_prev = m_col_ref[j]                               # (1, TN)
    mc_new = jnp.maximum(mc_prev, jnp.max(logits, axis=0, keepdims=True))
    p_col = jnp.exp(logits - mc_new)                     # (TM, TN)
    s_col_ref[j] = (s_col_ref[j] * jnp.exp(mc_prev - mc_new)
                    + jnp.sum(p_col, axis=0, keepdims=True))
    m_col_ref[j] = mc_new

    # ---- diagonal (label) logits, taken from the already-computed tile ------
    # With decoupled TM/TN the diagonal may cross tiles where i != j, so the
    # guard is the generic interval-overlap test.
    row0 = i * tm
    col0 = j * tn

    @pl.when((row0 < col0 + tn) & (col0 < row0 + tm))
    def _():
        r = lax.broadcasted_iota(jnp.int32, (tm, tn), 0) + row0
        c = lax.broadcasted_iota(jnp.int32, (tm, tn), 1) + col0
        diag = jnp.where(r == c, logits, 0.0)
        acc_ref[...] += -2.0 * jnp.sum(diag, keepdims=True)

    # ---- finalize a completed row stripe -------------------------------------
    @pl.when(j == num_col_tiles - 1)
    def _():
        lse_row = m_row_ref[...] + jnp.log(s_row_ref[...])   # (TM, 1)
        acc_ref[...] += jnp.sum(lse_row, keepdims=True)

    # ---- finalize a completed column stripe ----------------------------------
    @pl.when(i == num_row_tiles - 1)
    def _():
        lse_col = m_col_ref[j] + jnp.log(s_col_ref[j])        # (1, TN)
        acc_ref[...] += jnp.sum(lse_col, keepdims=True)

    # ---- final scalar loss ----------------------------------------------------
    @pl.when((i == num_row_tiles - 1) & (j == num_col_tiles - 1))
    def _():
        loss_ref[...] = acc_ref[...] * (0.5 / n)


def clip_loss(image_features, text_features, logit_scale, output_dict=True,
              tm=None, tn=None, compute_dtype=None):
    """Single-device CLIP contrastive loss via a tiled Pallas TPU kernel.

    tm / tn: row / column tiles of the (never materialized) NxN logits matrix.
    compute_dtype: dtype fed to the MXU.  Pass jnp.bfloat16 for f32 inputs to
      get the full MXU rate and halve HBM traffic (accumulation stays f32).
    """
    # TODO(synk): world_size > 1 all_gather path not implemented (needs
    # make_async_remote_copy ring collectives); this is the world_size == 1 path.
    n, d = image_features.shape
    assert text_features.shape == (n, d)

    if compute_dtype is None:
        compute_dtype = image_features.dtype
    compute_dtype = jnp.dtype(compute_dtype)
    image_features = image_features.astype(compute_dtype)
    text_features = text_features.astype(compute_dtype)
    itemsize = compute_dtype.itemsize

    # Sublane granularity for the feature-tile second-to-last dim: 8 (f32),
    # 16 (bf16/f16), 32 (8-bit).  A tile must be a multiple of it or == n.
    granule = {4: 8, 2: 16, 1: 32}.get(itemsize, 8)

    # VMEM budget per generation (v5e/v6e: 128 MiB, v7x: 64 MiB per TC).
    try:
        vmem_phys = int(pltpu.get_tpu_info().vmem_capacity_bytes)
    except Exception:
        vmem_phys = 64 * 1024 * 1024       # conservative (v7x per-TC) fallback
    tile_budget = int(vmem_phys * 0.6)

    # Tile selection.  TM controls HBM traffic (text re-streamed N/TM times);
    # TN >= 256 keeps v6e/v7x's 256-wide MXUs fed.  Shrink to fit VMEM.
    if tm is None or tn is None:
        tm_t, tn_t = 1024, 512
        tm_c = tn_c = None
        for _ in range(8):
            tm_c = tm if tm is not None else _largest_divisor_tile(n, tm_t, granule)
            tn_c = tn if tn is not None else _largest_divisor_tile(n, tn_t, granule)
            if _vmem_estimate_bytes(n, d, tm_c, tn_c, itemsize) <= tile_budget:
                break
            if tm is None and tm_t > 128:
                tm_t //= 2
            elif tn is None and tn_t > 128:
                tn_t //= 2
            else:
                break
        tm, tn = tm_c, tn_c

    assert n % tm == 0 and n % tn == 0, "tiles must divide the batch size"
    assert tm == n or tm % granule == 0, (
        f"row tile {tm} must be a multiple of {granule} for dtype {compute_dtype}")
    assert tn == n or tn % granule == 0, (
        f"col tile {tn} must be a multiple of {granule} for dtype {compute_dtype}")

    num_row_tiles = n // tm
    num_col_tiles = n // tn

    # Derive the scoped-VMEM limit from the actual tile/scratch sizes.
    vmem_limit = min(
        max(32 * 1024 * 1024,
            int(1.25 * _vmem_estimate_bytes(n, d, tm, tn, itemsize))),
        int(vmem_phys * 0.9))

    scale = jnp.reshape(jnp.asarray(logit_scale, jnp.float32), (1,))
    kernel = functools.partial(_clip_loss_kernel, n, tm, tn,
                               num_row_tiles, num_col_tiles, compute_dtype)

    loss = pl.pallas_call(
        kernel,
        out_shape=jax.ShapeDtypeStruct((1, 1), jnp.float32),
        grid=(num_row_tiles, num_col_tiles),
        in_specs=[
            pl.BlockSpec(memory_space=pltpu.SMEM),             # logit_scale (f32)
            pl.BlockSpec((tm, d), lambda i, j: (i, 0)),        # image rows i
            pl.BlockSpec((tn, d), lambda i, j: (j, 0)),        # text rows j (cols)
        ],
        out_specs=pl.BlockSpec((1, 1), lambda i, j: (0, 0)),
        scratch_shapes=[
            pltpu.VMEM((tm, d), compute_dtype),                # scale-folded img cache
            pltpu.VMEM((tm, 1), jnp.float32),                  # m_row
            pltpu.VMEM((tm, 1), jnp.float32),                  # s_row
            pltpu.VMEM((num_col_tiles, 1, tn), jnp.float32),   # m_col (persists over i)
            pltpu.VMEM((num_col_tiles, 1, tn), jnp.float32),   # s_col (persists over i)
            pltpu.VMEM((1, 1), jnp.float32),                   # loss numerator acc
        ],
        compiler_params=pltpu.CompilerParams(
            # Column accumulators persist across the outer (row) axis, so both
            # axes must be sequential ("arbitrary") for correctness.
            # TODO(synk): v7x megacore — core-split the row axis with per-core
            # column accumulators merged in a tiny epilogue.
            dimension_semantics=("arbitrary", "arbitrary"),
            vmem_limit_bytes=vmem_limit,
        ),
    )(scale, image_features, text_features)

    total_loss = loss[0, 0]
    return {"contrastive_loss": total_loss} if output_dict else total_loss


def _reference_loss(img, txt, scale):
    img = img.astype(jnp.float32)
    txt = txt.astype(jnp.float32)
    logits_i = scale * img @ txt.T
    logits_t = scale * txt @ img.T
    labels = jnp.arange(img.shape[0])

    def ce(logits, labels):
        logp = jax.nn.log_softmax(logits, axis=-1)
        return -jnp.mean(logp[jnp.arange(logits.shape[0]), labels])

    return (ce(logits_i, labels) + ce(logits_t, labels)) / 2.0


if __name__ == "__main__":
    key = jax.random.PRNGKey(0)
    k1, k2, k3, k4 = jax.random.split(key, 4)

    def l2norm(x):
        return x / jnp.linalg.norm(x, axis=-1, keepdims=True)

    # CLIP convention: logit_scale = exp(learnable temperature), init exp(ln(1/0.07))
    logit_scale = jnp.exp(jnp.float32(jnp.log(1.0 / 0.07)))

    # ---- small single-tile check (batch=8, dim=32, f32) ----------------------
    N, D = 8, 32
    img = l2norm(jax.random.normal(k1, (N, D), dtype=jnp.float32))
    txt = l2norm(jax.random.normal(k2, (N, D), dtype=jnp.float32))
    out = clip_loss(img, txt, logit_scale, output_dict=True)
    loss = jax.block_until_ready(out["contrastive_loss"])
    ref = _reference_loss(img, txt, logit_scale)
    assert jnp.allclose(loss, ref, atol=1e-4, rtol=1e-4), (loss, ref)

    # ---- multi-tile check with decoupled TM != TN (f32) ----------------------
    N2, D2 = 256, 64
    img2 = l2norm(jax.random.normal(k3, (N2, D2), dtype=jnp.float32))
    txt2 = l2norm(jax.random.normal(k4, (N2, D2), dtype=jnp.float32))
    loss2 = jax.block_until_ready(
        clip_loss(img2, txt2, logit_scale, output_dict=False, tm=128, tn=64))
    ref2 = _reference_loss(img2, txt2, logit_scale)
    assert jnp.allclose(loss2, ref2, atol=1e-3, rtol=1e-4), (loss2, ref2)

    # ---- bf16-MXU path (wrapper casts operands, f32 accumulation) ------------
    loss3 = jax.block_until_ready(
        clip_loss(img2, txt2, logit_scale, output_dict=False,
                  tm=128, tn=64, compute_dtype=jnp.bfloat16))
    ref3 = _reference_loss(img2.astype(jnp.bfloat16).astype(jnp.float32),
                           txt2.astype(jnp.bfloat16).astype(jnp.float32),
                           logit_scale)
    assert jnp.allclose(loss3, ref3, atol=5e-2, rtol=2e-2), (loss3, ref3)

    print("KERNEL_OK")
</pallas_src>

<mosaic_0001>
module attributes {stable_mosaic.version = 11 : i64} {
  func.func @_clip_loss_kernel(%arg0: i32, %arg1: i32, %arg2: memref<1xf32, #tpu.memory_space<smem>>, %arg3: memref<8x32xf32, #tpu.memory_space<vmem>>, %arg4: memref<8x32xf32, #tpu.memory_space<vmem>>, %arg5: memref<1x1xf32, #tpu.memory_space<vmem>>, %arg6: memref<8x32xf32, #tpu.memory_space<vmem>>, %arg7: memref<8x1xf32, #tpu.memory_space<vmem>>, %arg8: memref<8x1xf32, #tpu.memory_space<vmem>>, %arg9: memref<1x1x8xf32, #tpu.memory_space<vmem>>, %arg10: memref<1x1x8xf32, #tpu.memory_space<vmem>>, %arg11: memref<1x1xf32, #tpu.memory_space<vmem>>) attributes {dimension_semantics = [#tpu.dimension_semantics<arbitrary>, #tpu.dimension_semantics<arbitrary>], iteration_bounds = array<i64: 1, 1>, scalar_prefetch = 0 : i64, scratch_operands = 6 : i64, tpu.core_type = #tpu.core_type<tc>, window_params = [{transform_indices = @transform_0, window_bounds = array<i64: 1>}, {transform_indices = @transform_1, window_bounds = array<i64: 8, 32>}, {transform_indices = @transform_2, window_bounds = array<i64: 8, 32>}, {pipeline_mode = #tpu.pipeline_mode<synchronous>, transform_indices = @transform_3, window_bounds = array<i64: 1, 1>}]} {
    %c0 = arith.constant 0 : index
    %0 = memref.load %arg2[%c0] : memref<1xf32, #tpu.memory_space<smem>>
    %c0_i32 = arith.constant 0 : i32
    %1 = arith.cmpi eq, %arg0, %c0_i32 : i32
    %c0_i32_0 = arith.constant 0 : i32
    %2 = arith.cmpi eq, %arg1, %c0_i32_0 : i32
    %3 = arith.andi %1, %2 : i1
    %4 = arith.extui %3 : i1 to i32
    %c0_i32_1 = arith.constant 0 : i32
    %5 = arith.cmpi ne, %4, %c0_i32_1 : i32
    scf.if %5 {
      %cst_41 = arith.constant 0.000000e+00 : f32
      %77 = vector.broadcast %cst_41 : f32 to vector<1x1xf32>
      %c0_42 = arith.constant 0 : index
      %c0_43 = arith.constant 0 : index
      %78 = vector.load %arg11[%c0_42, %c0_43] : memref<1x1xf32, #tpu.memory_space<vmem>>, vector<1x1xf32>
      tpu.vector_store %arg11[%c0_42, %c0_43], %77 {strides = array<i32>} : memref<1x1xf32, #tpu.memory_space<vmem>>, vector<1x1xf32>,
    } else {
    }
    %c0_i32_2 = arith.constant 0 : i32
    %6 = arith.cmpi eq, %arg1, %c0_i32_2 : i32
    %7 = arith.extui %6 : i1 to i32
    %c0_i32_3 = arith.constant 0 : i32
    %8 = arith.cmpi ne, %7, %c0_i32_3 : i32
    scf.if %8 {
      %c0_41 = arith.constant 0 : index
      %c0_42 = arith.constant 0 : index
      %77 = vector.load %arg3[%c0_41, %c0_42] : memref<8x32xf32, #tpu.memory_space<vmem>>, vector<8x32xf32>
      %78 = vector.broadcast %0 : f32 to vector<8x32xf32>
      %79 = arith.mulf %77, %78 : vector<8x32xf32>
      %c0_43 = arith.constant 0 : index
      %c0_44 = arith.constant 0 : index
      %80 = vector.load %arg6[%c0_43, %c0_44] : memref<8x32xf32, #tpu.memory_space<vmem>>, vector<8x32xf32>
      tpu.vector_store %arg6[%c0_43, %c0_44], %79 {strides = array<i32>} : memref<8x32xf32, #tpu.memory_space<vmem>>, vector<8x32xf32>,
      %cst_45 = arith.constant 0xFF800000 : f32
      %81 = vector.broadcast %cst_45 : f32 to vector<8x1xf32>
      %c0_46 = arith.constant 0 : index
      %c0_47 = arith.constant 0 : index
      %82 = vector.load %arg7[%c0_46, %c0_47] : memref<8x1xf32, #tpu.memory_space<vmem>>, vector<8x1xf32>
      tpu.vector_store %arg7[%c0_46, %c0_47], %81 {strides = array<i32>} : memref<8x1xf32, #tpu.memory_space<vmem>>, vector<8x1xf32>,
      %cst_48 = arith.constant 0.000000e+00 : f32
      %83 = vector.broadcast %cst_48 : f32 to vector<8x1xf32>
      %c0_49 = arith.constant 0 : index
      %c0_50 = arith.constant 0 : index
      %84 = vector.load %arg8[%c0_49, %c0_50] : memref<8x1xf32, #tpu.memory_space<vmem>>, vector<8x1xf32>
      tpu.vector_store %arg8[%c0_49, %c0_50], %83 {strides = array<i32>} : memref<8x1xf32, #tpu.memory_space<vmem>>, vector<8x1xf32>,
    } else {
    }
    %c0_i32_4 = arith.constant 0 : i32
    %9 = arith.cmpi eq, %arg0, %c0_i32_4 : i32
    %10 = arith.extui %9 : i1 to i32
    %c0_i32_5 = arith.constant 0 : i32
    %11 = arith.cmpi ne, %10, %c0_i32_5 : i32
    scf.if %11 {
      %cst_41 = arith.constant 0xFF800000 : f32
      %77 = vector.broadcast %cst_41 : f32 to vector<1x8xf32>
      %78 = arith.index_cast %arg1 : i32 to index
      %c0_42 = arith.constant 0 : index
      %c0_43 = arith.constant 0 : index
      %79 = vector.load %arg9[%78, %c0_42, %c0_43] : memref<1x1x8xf32, #tpu.memory_space<vmem>>, vector<1x1x8xf32>
      %80 = vector.shape_cast %79 : vector<1x1x8xf32> to vector<1x8xf32>
      %81 = vector.shape_cast %77 : vector<1x8xf32> to vector<1x1x8xf32>
      tpu.vector_store %arg9[%78, %c0_42, %c0_43], %81 {strides = array<i32>} : memref<1x1x8xf32, #tpu.memory_space<vmem>>, vector<1x1x8xf32>,
      %cst_44 = arith.constant 0.000000e+00 : f32
      %82 = vector.broadcast %cst_44 : f32 to vector<1x8xf32>
      %83 = arith.index_cast %arg1 : i32 to index
      %c0_45 = arith.constant 0 : index
      %c0_46 = arith.constant 0 : index
      %84 = vector.load %arg10[%83, %c0_45, %c0_46] : memref<1x1x8xf32, #tpu.memory_space<vmem>>, vector<1x1x8xf32>
      %85 = vector.shape_cast %84 : vector<1x1x8xf32> to vector<1x8xf32>
      %86 = vector.shape_cast %82 : vector<1x8xf32> to vector<1x1x8xf32>
      tpu.vector_store %arg10[%83, %c0_45, %c0_46], %86 {strides = array<i32>} : memref<1x1x8xf32, #tpu.memory_space<vmem>>, vector<1x1x8xf32>,
    } else {
    }
    %c0_6 = arith.constant 0 : index
    %c0_7 = arith.constant 0 : index
    %12 = vector.load %arg6[%c0_6, %c0_7] : memref<8x32xf32, #tpu.memory_space<vmem>>, vector<8x32xf32>
    %c0_8 = arith.constant 0 : index
    %c0_9 = arith.constant 0 : index
    %13 = vector.load %arg4[%c0_8, %c0_9] : memref<8x32xf32, #tpu.memory_space<vmem>>, vector<8x32xf32>
    %cst = arith.constant dense<0.000000e+00> : vector<8x8xf32>
    %14 = tpu.matmul %12, %13, %cst {dimension_numbers = #tpu.dot_dimension_numbers<[1], [1], [0], [0], [0, 0, 1, 0], [], []>} : vector<8x32xf32>, vector<8x32xf32>, vector<8x8xf32> -> vector<8x8xf32>
    %c0_10 = arith.constant 0 : index
    %c0_11 = arith.constant 0 : index
    %15 = vector.load %arg7[%c0_10, %c0_11] : memref<8x1xf32, #tpu.memory_space<vmem>>, vector<8x1xf32>
    %cst_12 = arith.constant dense<0xFF800000> : vector<8xf32>
    %16 = vector.multi_reduction <maximumf>, %14, %cst_12 [1] : vector<8x8xf32> to vector<8xf32>
    %17 = vector.shape_cast %16 : vector<8xf32> to vector<8x1xf32>
    %18 = arith.maximumf %15, %17 : vector<8x1xf32>
    %19 = vector.broadcast %18 : vector<8x1xf32> to vector<8x8xf32>
    %20 = arith.subf %14, %19 : vector<8x8xf32>
    %21 = math.exp %20 : vector<8x8xf32>
    %c0_13 = arith.constant 0 : index
    %c0_14 = arith.constant 0 : index
    %22 = vector.load %arg8[%c0_13, %c0_14] : memref<8x1xf32, #tpu.memory_space<vmem>>, vector<8x1xf32>
    %23 = arith.subf %15, %18 : vector<8x1xf32>
    %24 = math.exp %23 : vector<8x1xf32>
    %25 = arith.mulf %22, %24 : vector<8x1xf32>
    %cst_15 = arith.constant dense<0.000000e+00> : vector<8xf32>
    %26 = vector.multi_reduction <add>, %21, %cst_15 [1] : vector<8x8xf32> to vector<8xf32>
    %27 = vector.shape_cast %26 : vector<8xf32> to vector<8x1xf32>
    %28 = arith.addf %25, %27 : vector<8x1xf32>
    %c0_16 = arith.constant 0 : index
    %c0_17 = arith.constant 0 : index
    %29 = vector.load %arg8[%c0_16, %c0_17] : memref<8x1xf32, #tpu.memory_space<vmem>>, vector<8x1xf32>
    tpu.vector_store %arg8[%c0_16, %c0_17], %28 {strides = array<i32>} : memref<8x1xf32, #tpu.memory_space<vmem>>, vector<8x1xf32>,
    %c0_18 = arith.constant 0 : index
    %c0_19 = arith.constant 0 : index
    %30 = vector.load %arg7[%c0_18, %c0_19] : memref<8x1xf32, #tpu.memory_space<vmem>>, vector<8x1xf32>
    tpu.vector_store %arg7[%c0_18, %c0_19], %18 {strides = array<i32>} : memref<8x1xf32, #tpu.memory_space<vmem>>, vector<8x1xf32>,
    %31 = arith.index_cast %arg1 : i32 to index
    %c0_20 = arith.constant 0 : index
    %c0_21 = arith.constant 0 : index
    %32 = vector.load %arg9[%31, %c0_20, %c0_21] : memref<1x1x8xf32, #tpu.memory_space<vmem>>, vector<1x1x8xf32>
    %33 = vector.shape_cast %32 : vector<1x1x8xf32> to vector<1x8xf32>
    %cst_22 = arith.constant dense<0xFF800000> : vector<8xf32>
    %34 = vector.multi_reduction <maximumf>, %14, %cst_22 [0] : vector<8x8xf32> to vector<8xf32>
    %35 = vector.shape_cast %34 : vector<8xf32> to vector<1x8xf32>
    %36 = arith.maximumf %33, %35 : vector<1x8xf32>
    %37 = vector.broadcast %36 : vector<1x8xf32> to vector<8x8xf32>
    %38 = arith.subf %14, %37 : vector<8x8xf32>
    %39 = math.exp %38 : vector<8x8xf32>
    %40 = arith.index_cast %arg1 : i32 to index
    %c0_23 = arith.constant 0 : index
    %c0_24 = arith.constant 0 : index
    %41 = vector.load %arg10[%40, %c0_23, %c0_24] : memref<1x1x8xf32, #tpu.memory_space<vmem>>, vector<1x1x8xf32>
    %42 = vector.shape_cast %41 : vector<1x1x8xf32> to vector<1x8xf32>
    %43 = arith.subf %33, %36 : vector<1x8xf32>
    %44 = math.exp %43 : vector<1x8xf32>
    %45 = arith.mulf %42, %44 : vector<1x8xf32>
    %cst_25 = arith.constant dense<0.000000e+00> : vector<8xf32>
    %46 = vector.multi_reduction <add>, %39, %cst_25 [0] : vector<8x8xf32> to vector<8xf32>
    %47 = vector.shape_cast %46 : vector<8xf32> to vector<1x8xf32>
    %48 = arith.addf %45, %47 : vector<1x8xf32>
    %49 = arith.index_cast %arg1 : i32 to index
    %c0_26 = arith.constant 0 : index
    %c0_27 = arith.constant 0 : index
    %50 = vector.load %arg10[%49, %c0_26, %c0_27] : memref<1x1x8xf32, #tpu.memory_space<vmem>>, vector<1x1x8xf32>
    %51 = vector.shape_cast %50 : vector<1x1x8xf32> to vector<1x8xf32>
    %52 = vector.shape_cast %48 : vector<1x8xf32> to vector<1x1x8xf32>
    tpu.vector_store %arg10[%49, %c0_26, %c0_27], %52 {strides = array<i32>} : memref<1x1x8xf32, #tpu.memory_space<vmem>>, vector<1x1x8xf32>,
    %53 = arith.index_cast %arg1 : i32 to index
    %c0_28 = arith.constant 0 : index
    %c0_29 = arith.constant 0 : index
    %54 = vector.load %arg9[%53, %c0_28, %c0_29] : memref<1x1x8xf32, #tpu.memory_space<vmem>>, vector<1x1x8xf32>
    %55 = vector.shape_cast %54 : vector<1x1x8xf32> to vector<1x8xf32>
    %56 = vector.shape_cast %36 : vector<1x8xf32> to vector<1x1x8xf32>
    tpu.vector_store %arg9[%53, %c0_28, %c0_29], %56 {strides = array<i32>} : memref<1x1x8xf32, #tpu.memory_space<vmem>>, vector<1x1x8xf32>,
    %c8_i32 = arith.constant 8 : i32
    %57 = arith.muli %arg0, %c8_i32 : i32
    %c8_i32_30 = arith.constant 8 : i32
    %58 = arith.muli %arg1, %c8_i32_30 : i32
    %c8_i32_31 = arith.constant 8 : i32
    %59 = arith.addi %58, %c8_i32_31 : i32
    %60 = arith.cmpi slt, %57, %59 : i32
    %c8_i32_32 = arith.constant 8 : i32
    %61 = arith.addi %57, %c8_i32_32 : i32
    %62 = arith.cmpi slt, %58, %61 : i32
    %63 = arith.andi %60, %62 : i1
    %64 = arith.extui %63 : i1 to i32
    %c0_i32_33 = arith.constant 0 : i32
    %65 = arith.cmpi ne, %64, %c0_i32_33 : i32
    scf.if %65 {
      %77 = tpu.iota {dimensions = array<i32: 0>} : vector<8x8xi32>
      %78 = vector.broadcast %57 : i32 to vector<8x8xi32>
      %79 = arith.addi %77, %78 : vector<8x8xi32>
      %80 = tpu.iota {dimensions = array<i32: 1>} : vector<8x8xi32>
      %81 = vector.broadcast %58 : i32 to vector<8x8xi32>
      %82 = arith.addi %80, %81 : vector<8x8xi32>
      %83 = arith.cmpi eq, %79, %82 : vector<8x8xi32>
      %cst_41 = arith.constant 0.000000e+00 : f32
      %84 = vector.broadcast %cst_41 : f32 to vector<8x8xf32>
      %85 = arith.select %83, %14, %84 : vector<8x8xi1>, vector<8x8xf32>
      %c0_42 = arith.constant 0 : index
      %c0_43 = arith.constant 0 : index
      %86 = vector.load %arg11[%c0_42, %c0_43] : memref<1x1xf32, #tpu.memory_space<vmem>>, vector<1x1xf32>
      %87 = vector.shape_cast %85 : vector<8x8xf32> to vector<1x8x8xf32>
      %cst_44 = arith.constant dense<0.000000e+00> : vector<1xf32>
      %88 = vector.multi_reduction <add>, %87, %cst_44 [1, 2] : vector<1x8x8xf32> to vector<1xf32>
      %89 = vector.shape_cast %88 : vector<1xf32> to vector<1x1x1xf32>
      %90 = vector.extract %89[0, 0, 0] : f32 from vector<1x1x1xf32>
      %91 = vector.broadcast %90 : f32 to vector<1x1xf32>
      %cst_45 = arith.constant -2.000000e+00 : f32
      %92 = vector.broadcast %cst_45 : f32 to vector<1x1xf32>
      %93 = arith.mulf %92, %91 : vector<1x1xf32>
      %94 = arith.addf %86, %93 : vector<1x1xf32>
      %c0_46 = arith.constant 0 : index
      %c0_47 = arith.constant 0 : index
      %95 = vector.load %arg11[%c0_46, %c0_47] : memref<1x1xf32, #tpu.memory_space<vmem>>, vector<1x1xf32>
      tpu.vector_store %arg11[%c0_46, %c0_47], %94 {strides = array<i32>} : memref<1x1xf32, #tpu.memory_space<vmem>>, vector<1x1xf32>,
    } else {
    }
    %c0_i32_34 = arith.constant 0 : i32
    %66 = arith.cmpi eq, %arg1, %c0_i32_34 : i32
    %67 = arith.extui %66 : i1 to i32
    %c0_i32_35 = arith.constant 0 : i32
    %68 = arith.cmpi ne, %67, %c0_i32_35 : i32
    scf.if %68 {
      %c0_41 = arith.constant 0 : index
      %c0_42 = arith.constant 0 : index
      %77 = vector.load %arg7[%c0_41, %c0_42] : memref<8x1xf32, #tpu.memory_space<vmem>>, vector<8x1xf32>
      %c0_43 = arith.constant 0 : index
      %c0_44 = arith.constant 0 : index
      %78 = vector.load %arg8[%c0_43, %c0_44] : memref<8x1xf32, #tpu.memory_space<vmem>>, vector<8x1xf32>
      %79 = math.log %78 : vector<8x1xf32>
      %80 = arith.addf %77, %79 : vector<8x1xf32>
      %c0_45 = arith.constant 0 : index
      %c0_46 = arith.constant 0 : index
      %81 = vector.load %arg11[%c0_45, %c0_46] : memref<1x1xf32, #tpu.memory_space<vmem>>, vector<1x1xf32>
      %82 = vector.shape_cast %80 : vector<8x1xf32> to vector<1x8x1xf32>
      %cst_47 = arith.constant dense<0.000000e+00> : vector<1xf32>
      %83 = vector.multi_reduction <add>, %82, %cst_47 [1, 2] : vector<1x8x1xf32> to vector<1xf32>
      %84 = vector.shape_cast %83 : vector<1xf32> to vector<1x1x1xf32>
      %85 = vector.extract %84[0, 0, 0] : f32 from vector<1x1x1xf32>
      %86 = vector.broadcast %85 : f32 to vector<1x1xf32>
      %87 = arith.addf %81, %86 : vector<1x1xf32>
      %c0_48 = arith.constant 0 : index
      %c0_49 = arith.constant 0 : index
      %88 = vector.load %arg11[%c0_48, %c0_49] : memref<1x1xf32, #tpu.memory_space<vmem>>, vector<1x1xf32>
      tpu.vector_store %arg11[%c0_48, %c0_49], %87 {strides = array<i32>} : memref<1x1xf32, #tpu.memory_space<vmem>>, vector<1x1xf32>,
    } else {
    }
    %c0_i32_36 = arith.constant 0 : i32
    %69 = arith.cmpi eq, %arg0, %c0_i32_36 : i32
    %70 = arith.extui %69 : i1 to i32
    %c0_i32_37 = arith.constant 0 : i32
    %71 = arith.cmpi ne, %70, %c0_i32_37 : i32
    scf.if %71 {
      %77 = arith.index_cast %arg1 : i32 to index
      %c0_41 = arith.constant 0 : index
      %c0_42 = arith.constant 0 : index
      %78 = vector.load %arg9[%77, %c0_41, %c0_42] : memref<1x1x8xf32, #tpu.memory_space<vmem>>, vector<1x1x8xf32>
      %79 = vector.shape_cast %78 : vector<1x1x8xf32> to vector<1x8xf32>
      %80 = arith.index_cast %arg1 : i32 to index
      %c0_43 = arith.constant 0 : index
      %c0_44 = arith.constant 0 : index
      %81 = vector.load %arg10[%80, %c0_43, %c0_44] : memref<1x1x8xf32, #tpu.memory_space<vmem>>, vector<1x1x8xf32>
      %82 = vector.shape_cast %81 : vector<1x1x8xf32> to vector<1x8xf32>
      %83 = math.log %82 : vector<1x8xf32>
      %84 = arith.addf %79, %83 : vector<1x8xf32>
      %c0_45 = arith.constant 0 : index
      %c0_46 = arith.constant 0 : index
      %85 = vector.load %arg11[%c0_45, %c0_46] : memref<1x1xf32, #tpu.memory_space<vmem>>, vector<1x1xf32>
      %86 = vector.shape_cast %84 : vector<1x8xf32> to vector<1x1x8xf32>
      %cst_47 = arith.constant dense<0.000000e+00> : vector<1xf32>
      %87 = vector.multi_reduction <add>, %86, %cst_47 [1, 2] : vector<1x1x8xf32> to vector<1xf32>
      %88 = vector.shape_cast %87 : vector<1xf32> to vector<1x1x1xf32>
      %89 = vector.extract %88[0, 0, 0] : f32 from vector<1x1x1xf32>
      %90 = vector.broadcast %89 : f32 to vector<1x1xf32>
      %91 = arith.addf %85, %90 : vector<1x1xf32>
      %c0_48 = arith.constant 0 : index
      %c0_49 = arith.constant 0 : index
      %92 = vector.load %arg11[%c0_48, %c0_49] : memref<1x1xf32, #tpu.memory_space<vmem>>, vector<1x1xf32>
      tpu.vector_store %arg11[%c0_48, %c0_49], %91 {strides = array<i32>} : memref<1x1xf32, #tpu.memory_space<vmem>>, vector<1x1xf32>,
    } else {
    }
    %c0_i32_38 = arith.constant 0 : i32
    %72 = arith.cmpi eq, %arg0, %c0_i32_38 : i32
    %c0_i32_39 = arith.constant 0 : i32
    %73 = arith.cmpi eq, %arg1, %c0_i32_39 : i32
    %74 = arith.andi %72, %73 : i1
    %75 = arith.extui %74 : i1 to i32
    %c0_i32_40 = arith.constant 0 : i32
    %76 = arith.cmpi ne, %75, %c0_i32_40 : i32
    scf.if %76 {
      %c0_41 = arith.constant 0 : index
      %c0_42 = arith.constant 0 : index
      %77 = vector.load %arg11[%c0_41, %c0_42] : memref<1x1xf32, #tpu.memory_space<vmem>>, vector<1x1xf32>
      %cst_43 = arith.constant 6.250000e-02 : f32
      %78 = vector.broadcast %cst_43 : f32 to vector<1x1xf32>
      %79 = arith.mulf %77, %78 : vector<1x1xf32>
      %c0_44 = arith.constant 0 : index
      %c0_45 = arith.constant 0 : index
      %80 = vector.load %arg5[%c0_44, %c0_45] : memref<1x1xf32, #tpu.memory_space<vmem>>, vector<1x1xf32>
      tpu.vector_store %arg5[%c0_44, %c0_45], %79 {strides = array<i32>} : memref<1x1xf32, #tpu.memory_space<vmem>>, vector<1x1xf32>,
    } else {
    }
    return
  }
  func.func @transform_0(%arg0: i32, %arg1: i32) -> i32 {
    %c0_i32 = arith.constant 0 : i32
    %c0_i32_0 = arith.constant 0 : i32
    return %c0_i32 : i32
  }
  func.func @transform_1(%arg0: i32, %arg1: i32) -> (i32, i32) {
    %c0_i32 = arith.constant 0 : i32
    %c0_i32_0 = arith.constant 0 : i32
    return %arg0, %c0_i32 : i32, i32
  }
  func.func @transform_2(%arg0: i32, %arg1: i32) -> (i32, i32) {
    %c0_i32 = arith.constant 0 : i32
    %c0_i32_0 = arith.constant 0 : i32
    return %arg1, %c0_i32 : i32, i32
  }
  func.func @transform_3(%arg0: i32, %arg1: i32) -> (i32, i32) {
    %c0_i32 = arith.constant 0 : i32
    %c0_i32_0 = arith.constant 0 : i32
    %c0_i32_1 = arith.constant 0 : i32
    return %c0_i32, %c0_i32_0 : i32, i32
  }
}

</mosaic_0001>

<llo_original>
// kernel: tpu_custom_call.1
$region0: #{tpu_custom_call.1}
  #allocation0 [shape = 'u32[]', space=smem, size = 0x4, offset = 0x4, fixed_abs, tag = 'smem constant byte address 0x4 - core index']
  #allocation1 [shape = 'u32[72,128]{1,0:T(1,128)}', space=vmem, size = 0x9000, scoped, tag = 'internal scratch']
  #allocation2 [shape = 'f32[8,32]{1,0:T(8,128)}', space=vmem, size = 0x1000, scoped, tag = 'scratch operand']
  #allocation3 [shape = 'f32[8,1]{1,0:T(8,128)}', space=vmem, size = 0x1000, scoped, tag = 'scratch operand']
  #allocation4 [shape = 'f32[8,1]{1,0:T(8,128)}', space=vmem, size = 0x1000, scoped, tag = 'scratch operand']
  #allocation5 [shape = 'f32[1,1,8]{2,1,0:T(1,128)}', space=vmem, size = 0x200, scoped, tag = 'scratch operand']
  #allocation6 [shape = 'f32[1,1,8]{2,1,0:T(1,128)}', space=vmem, size = 0x200, scoped, tag = 'scratch operand']
  #allocation7 [shape = 'f32[1,1]{1,0:T(1,128)}', space=vmem, size = 0x200, scoped, tag = 'scratch operand']
  #allocation8 [shape = 'f32[1]{0:T(128)S(6)}', space=smem, size = 0x200, scoped, tag = 'scoped memory for tpu_custom_call.1']
  %s0 = inlined_call_operand.<no memory space> [shape: f32[1], index: 0, kind: input, shape index: {}]
  %s1 = inlined_call_operand.hbm [shape: f32[8,32], index: 1, kind: input, shape index: {}]
  %s2 = inlined_call_operand.hbm [shape: f32[8,32], index: 2, kind: input, shape index: {}]
  %s3 = inlined_call_operand.hbm [shape: f32[1,1], index: 3, kind: output, shape index: {}]
  %s4 = sld [smem:[#allocation0]]
  $region58: #{tpu_custom_call.1} parent=0
    _
  %s6 = ssub.s32 1, %s4
  %s7 = scalar_select 0, %s6, %s4
  %8 = sst [smem:[#allocation8]] %s0
  $region1: #{tpu_custom_call.1} parent=0
    #allocation9 [shape = 'u8[4096]{0}', space=vmem, size = 0x1000, scoped, tag = 'input window, operand 1, single buffered']
    #allocation10 [shape = 's32[1]{0}', space=sflag, size = 0x4, scoped, tag = 'scoped memory for tpu_custom_call.1']
    #allocation11 [shape = 's32[1]{0}', space=sflag, size = 0x4, scoped, tag = 'scoped memory for tpu_custom_call.1']
    #allocation12 [shape = 'u8[4096]{0}', space=vmem, size = 0x1000, scoped, tag = 'input window, operand 2, single buffered']
    #allocation13 [shape = 's32[1]{0}', space=sflag, size = 0x4, scoped, tag = 'scoped memory for tpu_custom_call.1']
    #allocation14 [shape = 'u8[512]{0}', space=vmem, size = 0x400, scoped, tag = 'output window, operand 0, single buffered']
    %9 = vsyncpa [#allocation10], 0
    %10 = vsyncpa [#allocation13], 0
    %11 = vsyncpa [#allocation11], 0
    // Predicated region
    $region2: #{tpu_custom_call.1} parent=1 // pred_check
      _
    $region3: #{tpu_custom_call.1} parent=1 // pred_check_branch
      %13 = sbr.rel (0) target = $region5
    $region4: #{tpu_custom_call.1} parent=1 // pred_region
      _
    $region5: #{tpu_custom_call.1} parent=1 // pred_fallthru
      _
    // Predicated region
    $region6: #{tpu_custom_call.1} parent=1 // pred_check
      _
    $region7: #{tpu_custom_call.1} parent=1 // pred_check_branch
      %15 = sbr.rel (0) target = $region9
    $region8: #{tpu_custom_call.1} parent=1 // pred_region
      %17 = vsyncadd [#allocation10], 0
      %s19 = sshll.u32 %s1, 4
      %s20 = int_to_ptr.hbm [resolvable:$true] %s19
      %s21 = sshll.u32 [#allocation9], 4
      %s22 = int_to_ptr.vmem [resolvable:$true] %s21
      %24 = dma.hbm_to_vmem [thread:$0]  %s20, 128, %s22, [#allocation10]
    $region9: #{tpu_custom_call.1} parent=1 // pred_fallthru
      _
    // Predicated region
    $region10: #{tpu_custom_call.1} parent=1 // pred_check
      _
    $region11: #{tpu_custom_call.1} parent=1 // pred_check_branch
      %26 = sbr.rel (0) target = $region13
    $region12: #{tpu_custom_call.1} parent=1 // pred_region
      %28 = vsyncadd [#allocation13], 0
      %s30 = sshll.u32 %s2, 4
      %s31 = int_to_ptr.hbm [resolvable:$true] %s30
      %s32 = sshll.u32 [#allocation12], 4
      %s33 = int_to_ptr.vmem [resolvable:$true] %s32
      %35 = dma.hbm_to_vmem [thread:$0]  %s31, 128, %s33, [#allocation13]
    $region13: #{tpu_custom_call.1} parent=1 // pred_fallthru
      _
    // Predicated region
    $region14: #{tpu_custom_call.1} parent=1 // pred_check
      _
    $region15: #{tpu_custom_call.1} parent=1 // pred_check_branch
      %37 = sbr.rel (0) target = $region17
    $region16: #{tpu_custom_call.1} parent=1 // pred_region
      %39 = dma.done [#allocation10], 128
    $region17: #{tpu_custom_call.1} parent=1 // pred_fallthru
      _
    // Predicated region
    $region18: #{tpu_custom_call.1} parent=1 // pred_check
      _
    $region19: #{tpu_custom_call.1} parent=1 // pred_check_branch
      %41 = sbr.rel (0) target = $region21
    $region20: #{tpu_custom_call.1} parent=1 // pred_region
      %43 = dma.done [#allocation13], 128
    $region21: #{tpu_custom_call.1} parent=1 // pred_fallthru
      _
    %s44 = sld [smem:[#allocation8]]
    %p45 = scmp.eq.s32.totalorder 0, 0
    %p46 = scmp.eq.s32.totalorder 0, 0
    %p47 = pnand %p45, %p46
    %p48 = pneg %p47
    // Predicated region
    $region22: #{tpu_custom_call.1} parent=1 // pred_check
      _
    $region23: #{tpu_custom_call.1} parent=1 // pred_check_branch
      %50 = sbr.rel (%p47) target = $region25
    $region24: #{tpu_custom_call.1} parent=1 // pred_region
      %vm51 = vcmask 0
      %52 = vst.msk [vmem:[#allocation7] sm:$0x1] %vm51, 0.0
    $region25: #{tpu_custom_call.1} parent=1 // pred_fallthru
      _
    // Predicated region
    $region26: #{tpu_custom_call.1} parent=1 // pred_check
      %p53 = pneg %p46
    $region27: #{tpu_custom_call.1} parent=1 // pred_check_branch
      %55 = sbr.rel (%p53) target = $region29
    $region28: #{tpu_custom_call.1} parent=1 // pred_region
      %v56 = vld [vmem:[#allocation9] sm:$0xff]
      %v57 = vstv %s44
      %v58 = vmul.f32 %v56, %v57
      %vm59 = vcmask 261120
      %60 = vst.msk [vmem:[#allocation2] sm:$0xff] %vm59, %v58
      %vm61 = vcmask 7168
      %62 = vst.msk [vmem:[#allocation3] sm:$0xff] %vm61, -inf
      %63 = vst.msk [vmem:[#allocation4] sm:$0xff] %vm61, 0.0
    $region29: #{tpu_custom_call.1} parent=1 // pred_fallthru
      _
    // Predicated region
    $region30: #{tpu_custom_call.1} parent=1 // pred_check
      %p64 = pneg %p45
    $region31: #{tpu_custom_call.1} parent=1 // pred_check_branch
      %66 = sbr.rel (%p64) target = $region33
    $region32: #{tpu_custom_call.1} parent=1 // pred_region
      %vm67 = vcmask 57344
      %68 = vst.msk [vmem:[#allocation5] sm:$0x1] %vm67, -inf
      %69 = vst.msk [vmem:[#allocation6] sm:$0x1] %vm67, 0.0
    $region33: #{tpu_custom_call.1} parent=1 // pred_fallthru
      _
    %v70 = vld [vmem:[#allocation2] sm:$0xff]
    %v71 = vld [vmem:[#allocation12] sm:$0xff]
    %vm72 = vcmask 261120
    %v74 = vsel %vm72, %v70, 0
    %v77 = vsel %vm72, %v71, 0
    %79 = vmatpush.xpose.msra.mxu0 0.0
    %80 = vmatpush.xpose.msra.mxu0 0.0
    %81 = vmatpush.xpose.msra.mxu0 0.0
    %82 = vmatpush.xpose.msra.mxu0 0.0
    %83 = vmatpush.xpose.msra.mxu0 0.0
    %84 = vmatpush.xpose.msra.mxu0 0.0
    %85 = vmatpush.xpose.msra.mxu0 0.0
    %86 = vmatpush.xpose.msra.mxu0 0.0
    %87 = vmatpush.xpose.msra.mxu0 0.0
    %88 = vmatpush.xpose.msra.mxu0 0.0
    %89 = vmatpush.xpose.msra.mxu0 0.0
    %90 = vmatpush.xpose.msra.mxu0 0.0
    %91 = vmatpush.xpose.msra.mxu0 0.0
    %92 = vmatpush.xpose.msra.mxu0 0.0
    %93 = vmatpush.xpose.msra.mxu0 0.0
    %94 = vmatpush.xpose.msra.mxu0 %v77
    %95 = vmatmul.f32.gmra.mxu0 %v74
    %v96 = vpop.f32.mrf.mxu0
    %v97 = vadd.f32 0.0, %v96
    %98 = vdwg.mxu0
    %v99 = vld [vmem:[#allocation3] sm:$0xff]
    %vm100 = vcmask 64512
    %v101 = vsel %vm100, %v97, -inf
    %102 = vmax.xlane.f32.xlu0 %v101
    %v103 = vpop.xlane.xlu0 %102
    %v104 = vmax.f32 %v99, %v103
    %106 = vset.pattern.permute.xlu0 0
    %107 = vperm.xlu0 %106, %v104
    %v108 = vpop.permute.xlu0 %107
    %v110 = vsub.f32 %v97, %v108
    %v111 = vmul.f32 %v110, 1.442695
    %v112 = vpow.pop %v111
    %v113 = vld [vmem:[#allocation4] sm:$0xff]
    %v114 = vsub.f32 %v99, %v104
    %v115 = vmul.f32 %v114, 1.442695
    %v116 = vpow.pop %v115
    %v117 = vmul.f32 %v113, %v116
    %v118 = vsel %vm100, %v112, 0.0
    %119 = vadd.xlane.f32.xlu0 %v118
    %v120 = vpop.xlane.xlu0 %119
    %v121 = vadd.f32 %v117, %v120
    %vm122 = vcmask 7168
    %123 = vst.msk [vmem:[#allocation4] sm:$0xff] %vm122, %v121
    %124 = vst.msk [vmem:[#allocation3] sm:$0xff] %vm122, %v104
    %v125 = vld [vmem:[#allocation5] sm:$0x1]
    %v126 = vrot.slane %v101, 4
    %v127 = vmax.f32 %v101, %v126
    %v128 = vrot.slane %v127, 2
    %v129 = vmax.f32 %v127, %v128
    %v130 = vrot.slane %v129, 1
    %v131 = vmax.f32 %v129, %v130
    %v132 = vmax.f32 %v125, %v131
    %v134 = vperm.slane %v132, 0
    %v136 = vsub.f32 %v97, %v134
    %v137 = vmul.f32 %v136, 1.442695
    %v138 = vpow.pop %v137
    %v139 = vld [vmem:[#allocation6] sm:$0x1]
    %v140 = vsub.f32 %v125, %v132
    %v141 = vmul.f32 %v140, 1.442695
    %v142 = vpow.pop %v141
    %v143 = vmul.f32 %v139, %v142
    %v144 = vsel %vm100, %v138, 0.0
    %v145 = vrot.slane %v144, 4
    %v146 = vadd.f32 %v144, %v145
    %v147 = vrot.slane %v146, 2
    %v148 = vadd.f32 %v146, %v147
    %v149 = vrot.slane %v148, 1
    %v150 = vadd.f32 %v148, %v149
    %v151 = vadd.f32 %v143, %v150
    %vm152 = vcmask 57344
    %153 = vst.msk [vmem:[#allocation6] sm:$0x1] %vm152, %v151
    %154 = vst.msk [vmem:[#allocation5] sm:$0x1] %vm152, %v132
    %s155 = smul.u32 0, 8
    %s156 = smul.u32 0, 8
    %s157 = sadd.s32 %s156, 8
    %p158 = scmp.lt.s32.totalorder %s155, %s157
    %s159 = sadd.s32 %s155, 8
    %p160 = scmp.lt.s32.totalorder %s156, %s159
    %p161 = pnand %p158, %p160
    %p162 = pneg %p161
    // Predicated region
    $region34: #{tpu_custom_call.1} parent=1 // pred_check
      _
    $region35: #{tpu_custom_call.1} parent=1 // pred_check_branch
      %164 = sbr.rel (%p161) target = $region37
    $region36: #{tpu_custom_call.1} parent=1 // pred_region
      %v165 = vlaneseq
      %v166 = vshrl.u32 %v165, 7
      %v167 = vstv %s155
      %v168 = vadd.s32 %v166, %v167
      %v169 = vlaneseq
      %v170 = vand.u32 %v169, 127
      %v171 = vstv %s156
      %v172 = vadd.s32 %v170, %v171
      %vm173 = vcmp.eq.s32.totalorder %v168, %v172
      %v174 = vsel %vm173, %v97, 0.0
      %v175 = vld [vmem:[#allocation7] sm:$0x1]
      %v176 = vsel %vm100, %v174, 0.0
      %177 = vadd.xlane.f32.xlu0 %v176
      %v178 = vpop.xlane.xlu0 %177
      %v179 = vrot.slane %v178, 4
      %v180 = vadd.f32 %v178, %v179
      %v181 = vrot.slane %v180, 2
      %v182 = vadd.f32 %v180, %v181
      %v183 = vrot.slane %v182, 1
      %v184 = vadd.f32 %v182, %v183
      %s185 = vtos %v184
      %v186 = vstv %s185
      %v187 = vmul.f32 %v186, -2.0
      %v188 = vadd.f32 %v175, %v187
      %vm189 = vcmask 0
      %190 = vst.msk [vmem:[#allocation7] sm:$0x1] %vm189, %v188
    $region37: #{tpu_custom_call.1} parent=1 // pred_fallthru
      _
    // Predicated region
    $region38: #{tpu_custom_call.1} parent=1 // pred_check
      %p191 = pneg %p46
    $region39: #{tpu_custom_call.1} parent=1 // pred_check_branch
      %193 = sbr.rel (%p191) target = $region41
    $region40: #{tpu_custom_call.1} parent=1 // pred_region
      %v194 = vld [vmem:[#allocation3] sm:$0xff]
      %v195 = vld [vmem:[#allocation4] sm:$0xff]
      %v196 = vlog2.pop %v195
      %v197 = vmul.f32 %v196, 0.6931472
      %v198 = vadd.f32 %v194, %v197
      %v199 = vld [vmem:[#allocation7] sm:$0x1]
      %v200 = vsel %vm122, %v198, 0.0
      %201 = vadd.xlane.f32.xlu0 %v200
      %v202 = vpop.xlane.xlu0 %201
      %v203 = vrot.slane %v202, 4
      %v204 = vadd.f32 %v202, %v203
      %v205 = vrot.slane %v204, 2
      %v206 = vadd.f32 %v204, %v205
      %v207 = vrot.slane %v206, 1
      %v208 = vadd.f32 %v206, %v207
      %s209 = vtos %v208
      %v210 = vstv %s209
      %v211 = vadd.f32 %v199, %v210
      %vm212 = vcmask 0
      %213 = vst.msk [vmem:[#allocation7] sm:$0x1] %vm212, %v211
    $region41: #{tpu_custom_call.1} parent=1 // pred_fallthru
      _
    // Predicated region
    $region42: #{tpu_custom_call.1} parent=1 // pred_check
      %p214 = pneg %p45
    $region43: #{tpu_custom_call.1} parent=1 // pred_check_branch
      %216 = sbr.rel (%p214) target = $region45
    $region44: #{tpu_custom_call.1} parent=1 // pred_region
      %v217 = vld [vmem:[#allocation5] sm:$0x1]
      %v218 = vld [vmem:[#allocation6] sm:$0x1]
      %v219 = vlog2.pop %v218
      %v220 = vmul.f32 %v219, 0.6931472
      %v221 = vadd.f32 %v217, %v220
      %v222 = vld [vmem:[#allocation7] sm:$0x1]
      %v223 = vsel %vm152, %v221, 0.0
      %224 = vadd.xlane.f32.xlu0 %v223
      %v225 = vpop.xlane.xlu0 %224
      %v226 = vrot.slane %v225, 4
      %v227 = vadd.f32 %v225, %v226
      %v228 = vrot.slane %v227, 2
      %v229 = vadd.f32 %v227, %v228
      %v230 = vrot.slane %v229, 1
      %v231 = vadd.f32 %v229, %v230
      %s232 = vtos %v231
      %v233 = vstv %s232
      %v234 = vadd.f32 %v222, %v233
      %vm235 = vcmask 0
      %236 = vst.msk [vmem:[#allocation7] sm:$0x1] %vm235, %v234
    $region45: #{tpu_custom_call.1} parent=1 // pred_fallthru
      _
    // Predicated region
    $region46: #{tpu_custom_call.1} parent=1 // pred_check
      _
    $region47: #{tpu_custom_call.1} parent=1 // pred_check_branch
      %238 = sbr.rel (%p47) target = $region49
    $region48: #{tpu_custom_call.1} parent=1 // pred_region
      %v239 = vld [vmem:[#allocation7] sm:$0x1]
      %v240 = vmul.f32 %v239, 0.0625
      %vm241 = vcmask 0
      %242 = vst.msk [vmem:[#allocation14] sm:$0x1] %vm241, %v240
    $region49: #{tpu_custom_call.1} parent=1 // pred_fallthru
      _
    // Predicated region
    $region50: #{tpu_custom_call.1} parent=1 // pred_check
      _
    $region51: #{tpu_custom_call.1} parent=1 // pred_check_branch
      %244 = sbr.rel (0) target = $region53
    $region52: #{tpu_custom_call.1} parent=1 // pred_region
      %246 = vsyncadd [#allocation11], 0
      %s248 = sshll.u32 [#allocation14], 4
      %s249 = int_to_ptr.vmem [resolvable:$true] %s248
      %s250 = sshll.u32 %s3, 4
      %s251 = int_to_ptr.hbm [resolvable:$true] %s250
      %253 = dma.vmem_to_hbm [thread:$0]  %s249, 16, %s251, [#allocation11]
    $region53: #{tpu_custom_call.1} parent=1 // pred_fallthru
      _
    // Predicated region
    $region54: #{tpu_custom_call.1} parent=1 // pred_check
      _
    $region55: #{tpu_custom_call.1} parent=1 // pred_check_branch
      %255 = sbr.rel (0) target = $region57
    $region56: #{tpu_custom_call.1} parent=1 // pred_region
      %257 = dma.done [#allocation11], 16
    $region57: #{tpu_custom_call.1} parent=1 // pred_fallthru
      _
    %258 = vsyncpa [#allocation10], 1
    %259 = vsyncpa [#allocation13], 1
    %260 = vsyncpa [#allocation11], 1

</llo_original>
